<compile_context>
chip_gen: v6e
topology: v6e:2x2x1
jax: 0.10.0
libtpu: 0.0.40
codegen_flags: <defaults>
</compile_context>

<pallas_src>
import functools

import jax
import jax.numpy as jnp
from jax import lax
from jax.experimental import pallas as pl
from jax.experimental.pallas import tpu as pltpu


def _round_up(v, m):
    return ((v + m - 1) // m) * m


def _tpu_vmem_capacity_bytes():
    """Physical VMEM per TensorCore, or None if it cannot be queried."""
    try:
        info = pltpu.get_tpu_info()
        return getattr(info, "vmem_capacity_bytes", None)
    except Exception:
        return None


def gcn_kernel(a_ref, x_ref, w_ref, b_ref, wfc_ref, bfc_ref, out_ref,
               h0_ref, h1_ref, acc_ref, *, inv_n, n_real):
    """One grid step: row panel `r` of layer `l` for graph `b`.

    a_ref   (tm, N_pad)  bf16   row panel of the normalized adjacency
    x_ref   (N_pad, HP)  bf16   lane-padded input features (layer-0 input)
    w_ref   (HP, HP)     bf16   this layer's weight (zero-padded)
    b_ref   (1, HP)      f32    this layer's bias
    wfc/bfc (HP, OUT_P)/(1, OUT_P)  f32  linear head
    out_ref (1, OUT_P)   f32    per-graph output row
    h0/h1   (N_pad, HP)  bf16   VMEM ping-pong buffers (layer 0 / layer 1 outputs)
    acc_ref (1, HP)      f32    running row-sum of layer-2 output (for the mean)
    """
    l = pl.program_id(1)
    r = pl.program_id(2)
    num_r = pl.num_programs(2)
    tm = a_ref.shape[0]
    n_pad = a_ref.shape[1]
    row0 = pl.multiple_of(r * tm, tm)

    a_panel = a_ref[...]                    # (tm, N_pad) bf16
    w = w_ref[...]                          # (HP, HP)    bf16
    bias = b_ref[...]                       # (1, HP)     f32

    def conv_panel(h_prev):
        # relu(A[rows] @ h_prev @ W + b) for this row panel; f32 result.
        t = jnp.dot(a_panel, h_prev, preferred_element_type=jnp.float32)
        t = jnp.dot(t.astype(jnp.bfloat16), w, preferred_element_type=jnp.float32)
        return jnp.maximum(t + bias, 0.0)

    @pl.when((l == 2) & (r == 0))
    def _():
        acc_ref[...] = jnp.zeros_like(acc_ref)

    @pl.when(l == 0)
    def _():
        h0_ref[pl.ds(row0, tm), :] = conv_panel(x_ref[...]).astype(h0_ref.dtype)

    @pl.when(l == 1)
    def _():
        h1_ref[pl.ds(row0, tm), :] = conv_panel(h0_ref[...]).astype(h1_ref.dtype)

    @pl.when(l == 2)
    def _():
        panel = conv_panel(h1_ref[...])                       # (tm, HP) f32
        if n_real < n_pad:
            # Mask zero-padded (fake) node rows out of the mean.
            rid = lax.broadcasted_iota(jnp.int32, (tm, 1), 0) + row0
            panel = jnp.where(rid < n_real, panel, 0.0)
        acc_ref[...] += jnp.sum(panel, axis=0, keepdims=True)

    @pl.when((l == 2) & (r == num_r - 1))
    def _():
        # mean_n(h @ Wfc + bfc) == mean_n(h) @ Wfc + bfc  (head is affine).
        h_mean = acc_ref[...] * inv_n                         # (1, HP) f32
        out_ref[...] = (
            jnp.dot(h_mean, wfc_ref[...], preferred_element_type=jnp.float32)
            + bfc_ref[...]
        )


def gcn_forward(a_norm, x, params):
    """GCN forward. a_norm: (B,N,N) or (N,N) f32; x: (B,N,F) or (N,F) f32."""
    (w1, b1, w2, b2, w3, b3, wfc, bfc) = params   # wfc: (H2, out), bfc: (1, out)

    single = a_norm.ndim == 2
    if single:
        a_norm = a_norm[None]
        x = x[None]

    B, N, _ = a_norm.shape
    F = x.shape[-1]
    H0, H1, H2 = w1.shape[1], w2.shape[1], w3.shape[1]
    out_feats = wfc.shape[1]

    # One lane-dense width for features + all hidden layers (multiple of 128)
    # so the per-layer weights stack into a single (3, HP, HP) operand.
    HP = _round_up(max(F, H0, H1, H2), 128)
    OUT_P = _round_up(out_feats, 128)

    # Generation-aware row-tile size and VMEM budget.
    vmem_cap = _tpu_vmem_capacity_bytes()
    vmem_limit = int(vmem_cap * 3 // 4) if vmem_cap else None   # ~48 MiB v7x, ~96 MiB v5e/v6e
    tm_target = 512 if (vmem_cap or 0) >= 96 * 1024 * 1024 else 256

    if N <= tm_target:
        tm = _round_up(N, 8)
        n_pad = tm
    else:
        tm = tm_target
        n_pad = _round_up(N, tm)
    num_row_tiles = n_pad // tm

    f32, bf16 = jnp.float32, jnp.bfloat16

    # bf16 MXU operands (f32 accumulation happens inside the kernel).
    a_p = jnp.pad(a_norm.astype(f32),
                  ((0, 0), (0, n_pad - N), (0, n_pad - N))).astype(bf16)   # (B,Np,Np)
    x_p = jnp.pad(x.astype(f32),
                  ((0, 0), (0, n_pad - N), (0, HP - F))).astype(bf16)      # (B,Np,HP)

    def pad_w(w):
        return jnp.pad(w.astype(f32), ((0, HP - w.shape[0]), (0, HP - w.shape[1])))

    def pad_b(b):
        return jnp.pad(b.astype(f32), ((0, 0), (0, HP - b.shape[1])))

    w_stack = jnp.stack([pad_w(w1), pad_w(w2), pad_w(w3)]).astype(bf16)    # (3,HP,HP)
    b_stack = jnp.stack([pad_b(b1), pad_b(b2), pad_b(b3)])                 # (3,1,HP) f32

    # Head stays f32 (one tiny (1,HP)x(HP,OUT_P) matvec); padded columns are
    # sliced off below, so the in-kernel store is an unmasked full-lane vst.
    wfc_p = jnp.pad(wfc.astype(f32), ((0, HP - H2), (0, OUT_P - out_feats)))
    bfc_p = jnp.pad(bfc.astype(f32), ((0, 0), (0, OUT_P - out_feats)))

    kernel = functools.partial(gcn_kernel, inv_n=1.0 / N, n_real=N)

    out = pl.pallas_call(
        kernel,
        out_shape=jax.ShapeDtypeStruct((B, 1, OUT_P), jnp.float32),
        grid=(B, 3, num_row_tiles),
        in_specs=[
            # Adjacency row panel for this (graph, row-tile); re-streamed per layer.
            pl.BlockSpec((pl.Squeezed(), tm, n_pad), lambda b, l, r: (b, r, 0)),
            # Full (lane-padded) input features for this graph; resident across (l, r).
            pl.BlockSpec((pl.Squeezed(), n_pad, HP), lambda b, l, r: (b, 0, 0)),
            # Per-layer weight / bias, stacked along the layer grid axis.
            pl.BlockSpec((pl.Squeezed(), HP, HP), lambda b, l, r: (l, 0, 0)),
            pl.BlockSpec((pl.Squeezed(), 1, HP), lambda b, l, r: (l, 0, 0)),
            # Linear head (constant across the whole grid).
            # TODO(synk): single-buffer these constant blocks (pl.Buffered(1))
            # once confirmed supported; saves ~100 KiB VMEM.
            pl.BlockSpec((HP, OUT_P), lambda b, l, r: (0, 0)),
            pl.BlockSpec((1, OUT_P), lambda b, l, r: (0, 0)),
        ],
        out_specs=pl.BlockSpec((pl.Squeezed(), 1, OUT_P), lambda b, l, r: (b, 0, 0)),
        scratch_shapes=[
            pltpu.VMEM((n_pad, HP), bf16),      # h0: layer-0 output
            pltpu.VMEM((n_pad, HP), bf16),      # h1: layer-1 output
            pltpu.VMEM((1, HP), jnp.float32),   # running row-sum of layer-2 output
        ],
        compiler_params=pltpu.CompilerParams(
            # Batch axis -> both TensorCores on v7x; layer/row axes are sequential
            # (VMEM-resident h and the mean accumulator carry across them).
            dimension_semantics=("parallel", "arbitrary", "arbitrary"),
            vmem_limit_bytes=vmem_limit,
        ),
    )(a_p, x_p, w_stack, b_stack, wfc_p, bfc_p)

    out = out[:, 0, :out_feats]                  # (B, out_feats)
    return out[0] if single else out


def make_params(key, in_feats, hidden_dims, out_feats):
    ks = jax.random.split(key, 8)
    h0, h1, h2 = hidden_dims
    # GraphConv weights are (in, out); biases broadcast as (1, out).
    w1 = jax.random.normal(ks[0], (in_feats, h0), jnp.float32) * 0.1
    b1 = jax.random.normal(ks[1], (1, h0), jnp.float32) * 0.1
    w2 = jax.random.normal(ks[2], (h0, h1), jnp.float32) * 0.1
    b2 = jax.random.normal(ks[3], (1, h1), jnp.float32) * 0.1
    w3 = jax.random.normal(ks[4], (h1, h2), jnp.float32) * 0.1
    b3 = jax.random.normal(ks[5], (1, h2), jnp.float32) * 0.1
    # nn.Linear weight is (out, in); applied as x @ W^T + b -> pre-transpose here.
    wfc_t = jax.random.normal(ks[6], (out_feats, h2), jnp.float32) * 0.1
    bfc = jax.random.normal(ks[7], (1, out_feats), jnp.float32) * 0.1
    return (w1, b1, w2, b2, w3, b3, wfc_t.T, bfc)


def make_graph(key, n_nodes):
    # Random undirected graph with self-loops so every in-degree > 0
    # (DGL GraphConv with norm='both' requires non-zero in-degrees).
    a = (jax.random.uniform(key, (n_nodes, n_nodes)) < 0.4).astype(jnp.float32)
    a = jnp.maximum(a, a.T)
    a = jnp.maximum(a, jnp.eye(n_nodes, dtype=jnp.float32))
    deg = jnp.sum(a, axis=1)
    d_inv_sqrt = 1.0 / jnp.sqrt(deg)
    return a * d_inv_sqrt[:, None] * d_inv_sqrt[None, :]


def reference_forward(a_norm, x, params):
    (w1, b1, w2, b2, w3, b3, wfc, bfc) = params
    h = jnp.maximum(a_norm @ x @ w1 + b1, 0.0)
    h = jnp.maximum(a_norm @ h @ w2 + b2, 0.0)
    h = jnp.maximum(a_norm @ h @ w3 + b3, 0.0)
    h = h @ wfc + bfc
    return jnp.mean(h, axis=0)


if __name__ == "__main__":
    key = jax.random.PRNGKey(0)
    k_graph, k_feat, k_params, k_big = jax.random.split(key, 4)

    # --- small batched case (module-scale toy sizes) --------------------------
    B = 2
    n_nodes = 8
    in_feats = 4
    hidden_dims = (32, 32, 32)
    out_feats = 16

    graph_keys = jax.random.split(k_graph, B)
    feat_keys = jax.random.split(k_feat, B)
    a_norm = jnp.stack([make_graph(graph_keys[i], n_nodes) for i in range(B)])      # (2, 8, 8)
    features = jnp.stack([jax.random.normal(feat_keys[i], (n_nodes, in_feats),
                                            jnp.float32) for i in range(B)])        # (2, 8, 4)
    params = make_params(k_params, in_feats, hidden_dims, out_feats)

    out = jax.block_until_ready(gcn_forward(a_norm, features, params))
    assert out.shape == (B, out_feats)
    for i in range(B):
        ref = reference_forward(a_norm[i], features[i], params)
        # bf16 MXU operands -> loosened tolerance vs. the f32 reference.
        assert jnp.allclose(out[i], ref, atol=1.5e-2, rtol=1.5e-2), (
            jnp.max(jnp.abs(out[i] - ref)))

    # Single-graph path (exact original module semantics: mean over nodes).
    out_single = jax.block_until_ready(gcn_forward(a_norm[0], features[0], params))
    assert out_single.shape == (out_feats,)
    ref_single = reference_forward(a_norm[0], features[0], params)
    assert jnp.allclose(out_single, ref_single, atol=1.5e-2, rtol=1.5e-2)

    # --- larger single graph: exercises the row-tiled / node-padded path ------
    n_big = 600                       # pads to a multiple of the row tile; R > 1
    kb_graph, kb_feat = jax.random.split(k_big)
    a_big = make_graph(kb_graph, n_big)
    x_big = jax.random.normal(kb_feat, (n_big, in_feats), jnp.float32)
    out_big = jax.block_until_ready(gcn_forward(a_big, x_big, params))
    ref_big = reference_forward(a_big, x_big, params)
    assert out_big.shape == (out_feats,)
    assert jnp.allclose(out_big, ref_big, atol=1e-2, rtol=5e-2), (
        jnp.max(jnp.abs(out_big - ref_big)))

    print("KERNEL_OK")
</pallas_src>

<mosaic_0001>
module attributes {stable_mosaic.version = 11 : i64} {
  func.func @gcn_kernel(%arg0: i32, %arg1: i32, %arg2: i32, %arg3: memref<1x8x8xbf16, #tpu.memory_space<vmem>>, %arg4: memref<1x8x128xbf16, #tpu.memory_space<vmem>>, %arg5: memref<1x128x128xbf16, #tpu.memory_space<vmem>>, %arg6: memref<1x1x128xf32, #tpu.memory_space<vmem>>, %arg7: memref<128x128xf32, #tpu.memory_space<vmem>>, %arg8: memref<1x128xf32, #tpu.memory_space<vmem>>, %arg9: memref<1x1x128xf32, #tpu.memory_space<vmem>>, %arg10: memref<8x128xbf16, #tpu.memory_space<vmem>>, %arg11: memref<8x128xbf16, #tpu.memory_space<vmem>>, %arg12: memref<1x128xf32, #tpu.memory_space<vmem>>) attributes {dimension_semantics = [#tpu.dimension_semantics<parallel>, #tpu.dimension_semantics<arbitrary>, #tpu.dimension_semantics<arbitrary>], iteration_bounds = array<i64: 2, 3, 1>, scalar_prefetch = 0 : i64, scratch_operands = 3 : i64, tpu.core_type = #tpu.core_type<tc>, window_params = [{transform_indices = @transform_0, window_bounds = array<i64: 1, 8, 8>}, {transform_indices = @transform_1, window_bounds = array<i64: 1, 8, 128>}, {transform_indices = @transform_2, window_bounds = array<i64: 1, 128, 128>}, {transform_indices = @transform_3, window_bounds = array<i64: 1, 1, 128>}, {pipeline_mode = #tpu.pipeline_mode<synchronous>, transform_indices = @transform_4, window_bounds = array<i64: 128, 128>}, {pipeline_mode = #tpu.pipeline_mode<synchronous>, transform_indices = @transform_5, window_bounds = array<i64: 1, 128>}, {transform_indices = @transform_6, window_bounds = array<i64: 1, 1, 128>}]} {
    %c8_i32 = arith.constant 8 : i32
    %0 = arith.muli %arg2, %c8_i32 : i32
    %1 = tpu.assume_multiple %0, 8 : i32
    %c0 = arith.constant 0 : index
    %c0_0 = arith.constant 0 : index
    %c0_1 = arith.constant 0 : index
    %2 = vector.load %arg3[%c0, %c0_0, %c0_1] : memref<1x8x8xbf16, #tpu.memory_space<vmem>>, vector<1x8x8xbf16>
    %3 = vector.shape_cast %2 : vector<1x8x8xbf16> to vector<8x8xbf16>
    %c0_2 = arith.constant 0 : index
    %c0_3 = arith.constant 0 : index
    %c0_4 = arith.constant 0 : index
    %4 = vector.load %arg5[%c0_2, %c0_3, %c0_4] : memref<1x128x128xbf16, #tpu.memory_space<vmem>>, vector<1x128x128xbf16>
    %5 = vector.shape_cast %4 : vector<1x128x128xbf16> to vector<128x128xbf16>
    %c0_5 = arith.constant 0 : index
    %c0_6 = arith.constant 0 : index
    %c0_7 = arith.constant 0 : index
    %6 = vector.load %arg6[%c0_5, %c0_6, %c0_7] : memref<1x1x128xf32, #tpu.memory_space<vmem>>, vector<1x1x128xf32>
    %7 = vector.shape_cast %6 : vector<1x1x128xf32> to vector<1x128xf32>
    %c2_i32 = arith.constant 2 : i32
    %8 = arith.cmpi eq, %arg1, %c2_i32 : i32
    %c0_i32 = arith.constant 0 : i32
    %9 = arith.cmpi eq, %arg2, %c0_i32 : i32
    %10 = arith.andi %8, %9 : i1
    %11 = arith.extui %10 : i1 to i32
    %c0_i32_8 = arith.constant 0 : i32
    %12 = arith.cmpi ne, %11, %c0_i32_8 : i32
    scf.if %12 {
      %cst = arith.constant 0.000000e+00 : f32
      %27 = vector.broadcast %cst : f32 to vector<1x128xf32>
      %c0_17 = arith.constant 0 : index
      %c0_18 = arith.constant 0 : index
      %28 = vector.load %arg12[%c0_17, %c0_18] : memref<1x128xf32, #tpu.memory_space<vmem>>, vector<1x128xf32>
      tpu.vector_store %arg12[%c0_17, %c0_18], %27 {strides = array<i32>} : memref<1x128xf32, #tpu.memory_space<vmem>>, vector<1x128xf32>,
    } else {
    }
    %c0_i32_9 = arith.constant 0 : i32
    %13 = arith.cmpi eq, %arg1, %c0_i32_9 : i32
    %14 = arith.extui %13 : i1 to i32
    %c0_i32_10 = arith.constant 0 : i32
    %15 = arith.cmpi ne, %14, %c0_i32_10 : i32
    scf.if %15 {
      %c0_17 = arith.constant 0 : index
      %c0_18 = arith.constant 0 : index
      %c0_19 = arith.constant 0 : index
      %27 = vector.load %arg4[%c0_17, %c0_18, %c0_19] : memref<1x8x128xbf16, #tpu.memory_space<vmem>>, vector<1x8x128xbf16>
      %28 = vector.shape_cast %27 : vector<1x8x128xbf16> to vector<8x128xbf16>
      %cst = arith.constant dense<0.000000e+00> : vector<8x128xf32>
      %29 = tpu.matmul %3, %28, %cst {dimension_numbers = #tpu.dot_dimension_numbers<[1], [0], [0], [1], [0, 0, 1, 1], [], []>} : vector<8x8xbf16>, vector<8x128xbf16>, vector<8x128xf32> -> vector<8x128xf32>
      %30 = arith.truncf %29 : vector<8x128xf32> to vector<8x128xbf16>
      %cst_20 = arith.constant dense<0.000000e+00> : vector<8x128xf32>
      %31 = tpu.matmul %30, %5, %cst_20 {dimension_numbers = #tpu.dot_dimension_numbers<[1], [0], [0], [1], [0, 0, 1, 1], [], []>} : vector<8x128xbf16>, vector<128x128xbf16>, vector<8x128xf32> -> vector<8x128xf32>
      %32 = vector.broadcast %7 : vector<1x128xf32> to vector<8x128xf32>
      %33 = arith.addf %31, %32 : vector<8x128xf32>
      %cst_21 = arith.constant 0.000000e+00 : f32
      %34 = vector.broadcast %cst_21 : f32 to vector<8x128xf32>
      %35 = arith.maximumf %33, %34 : vector<8x128xf32>
      %36 = arith.truncf %35 : vector<8x128xf32> to vector<8x128xbf16>
      %37 = arith.index_cast %1 : i32 to index
      %c0_22 = arith.constant 0 : index
      %38 = vector.load %arg10[%37, %c0_22] : memref<8x128xbf16, #tpu.memory_space<vmem>>, vector<8x128xbf16>
      tpu.vector_store %arg10[%37, %c0_22], %36 {strides = array<i32>} : memref<8x128xbf16, #tpu.memory_space<vmem>>, vector<8x128xbf16>,
    } else {
    }
    %c1_i32 = arith.constant 1 : i32
    %16 = arith.cmpi eq, %arg1, %c1_i32 : i32
    %17 = arith.extui %16 : i1 to i32
    %c0_i32_11 = arith.constant 0 : i32
    %18 = arith.cmpi ne, %17, %c0_i32_11 : i32
    scf.if %18 {
      %c0_17 = arith.constant 0 : index
      %c0_18 = arith.constant 0 : index
      %27 = vector.load %arg10[%c0_17, %c0_18] : memref<8x128xbf16, #tpu.memory_space<vmem>>, vector<8x128xbf16>
      %cst = arith.constant dense<0.000000e+00> : vector<8x128xf32>
      %28 = tpu.matmul %3, %27, %cst {dimension_numbers = #tpu.dot_dimension_numbers<[1], [0], [0], [1], [0, 0, 1, 1], [], []>} : vector<8x8xbf16>, vector<8x128xbf16>, vector<8x128xf32> -> vector<8x128xf32>
      %29 = arith.truncf %28 : vector<8x128xf32> to vector<8x128xbf16>
      %cst_19 = arith.constant dense<0.000000e+00> : vector<8x128xf32>
      %30 = tpu.matmul %29, %5, %cst_19 {dimension_numbers = #tpu.dot_dimension_numbers<[1], [0], [0], [1], [0, 0, 1, 1], [], []>} : vector<8x128xbf16>, vector<128x128xbf16>, vector<8x128xf32> -> vector<8x128xf32>
      %31 = vector.broadcast %7 : vector<1x128xf32> to vector<8x128xf32>
      %32 = arith.addf %30, %31 : vector<8x128xf32>
      %cst_20 = arith.constant 0.000000e+00 : f32
      %33 = vector.broadcast %cst_20 : f32 to vector<8x128xf32>
      %34 = arith.maximumf %32, %33 : vector<8x128xf32>
      %35 = arith.truncf %34 : vector<8x128xf32> to vector<8x128xbf16>
      %36 = arith.index_cast %1 : i32 to index
      %c0_21 = arith.constant 0 : index
      %37 = vector.load %arg11[%36, %c0_21] : memref<8x128xbf16, #tpu.memory_space<vmem>>, vector<8x128xbf16>
      tpu.vector_store %arg11[%36, %c0_21], %35 {strides = array<i32>} : memref<8x128xbf16, #tpu.memory_space<vmem>>, vector<8x128xbf16>,
    } else {
    }
    %c2_i32_12 = arith.constant 2 : i32
    %19 = arith.cmpi eq, %arg1, %c2_i32_12 : i32
    %20 = arith.extui %19 : i1 to i32
    %c0_i32_13 = arith.constant 0 : i32
    %21 = arith.cmpi ne, %20, %c0_i32_13 : i32
    scf.if %21 {
      %c0_17 = arith.constant 0 : index
      %c0_18 = arith.constant 0 : index
      %27 = vector.load %arg11[%c0_17, %c0_18] : memref<8x128xbf16, #tpu.memory_space<vmem>>, vector<8x128xbf16>
      %cst = arith.constant dense<0.000000e+00> : vector<8x128xf32>
      %28 = tpu.matmul %3, %27, %cst {dimension_numbers = #tpu.dot_dimension_numbers<[1], [0], [0], [1], [0, 0, 1, 1], [], []>} : vector<8x8xbf16>, vector<8x128xbf16>, vector<8x128xf32> -> vector<8x128xf32>
      %29 = arith.truncf %28 : vector<8x128xf32> to vector<8x128xbf16>
      %cst_19 = arith.constant dense<0.000000e+00> : vector<8x128xf32>
      %30 = tpu.matmul %29, %5, %cst_19 {dimension_numbers = #tpu.dot_dimension_numbers<[1], [0], [0], [1], [0, 0, 1, 1], [], []>} : vector<8x128xbf16>, vector<128x128xbf16>, vector<8x128xf32> -> vector<8x128xf32>
      %31 = vector.broadcast %7 : vector<1x128xf32> to vector<8x128xf32>
      %32 = arith.addf %30, %31 : vector<8x128xf32>
      %cst_20 = arith.constant 0.000000e+00 : f32
      %33 = vector.broadcast %cst_20 : f32 to vector<8x128xf32>
      %34 = arith.maximumf %32, %33 : vector<8x128xf32>
      %c0_21 = arith.constant 0 : index
      %c0_22 = arith.constant 0 : index
      %35 = vector.load %arg12[%c0_21, %c0_22] : memref<1x128xf32, #tpu.memory_space<vmem>>, vector<1x128xf32>
      %cst_23 = arith.constant dense<0.000000e+00> : vector<128xf32>
      %36 = vector.multi_reduction <add>, %34, %cst_23 [0] : vector<8x128xf32> to vector<128xf32>
      %37 = vector.shape_cast %36 : vector<128xf32> to vector<1x128xf32>
      %38 = arith.addf %35, %37 : vector<1x128xf32>
      %c0_24 = arith.constant 0 : index
      %c0_25 = arith.constant 0 : index
      %39 = vector.load %arg12[%c0_24, %c0_25] : memref<1x128xf32, #tpu.memory_space<vmem>>, vector<1x128xf32>
      tpu.vector_store %arg12[%c0_24, %c0_25], %38 {strides = array<i32>} : memref<1x128xf32, #tpu.memory_space<vmem>>, vector<1x128xf32>,
    } else {
    }
    %c2_i32_14 = arith.constant 2 : i32
    %22 = arith.cmpi eq, %arg1, %c2_i32_14 : i32
    %c0_i32_15 = arith.constant 0 : i32
    %23 = arith.cmpi eq, %arg2, %c0_i32_15 : i32
    %24 = arith.andi %22, %23 : i1
    %25 = arith.extui %24 : i1 to i32
    %c0_i32_16 = arith.constant 0 : i32
    %26 = arith.cmpi ne, %25, %c0_i32_16 : i32
    scf.if %26 {
      %c0_17 = arith.constant 0 : index
      %c0_18 = arith.constant 0 : index
      %27 = vector.load %arg12[%c0_17, %c0_18] : memref<1x128xf32, #tpu.memory_space<vmem>>, vector<1x128xf32>
      %cst = arith.constant 1.250000e-01 : f32
      %28 = vector.broadcast %cst : f32 to vector<1x128xf32>
      %29 = arith.mulf %27, %28 : vector<1x128xf32>
      %c0_19 = arith.constant 0 : index
      %c0_20 = arith.constant 0 : index
      %30 = vector.load %arg7[%c0_19, %c0_20] : memref<128x128xf32, #tpu.memory_space<vmem>>, vector<128x128xf32>
      %cst_21 = arith.constant dense<0.000000e+00> : vector<1x128xf32>
      %31 = tpu.matmul %29, %30, %cst_21 {dimension_numbers = #tpu.dot_dimension_numbers<[1], [0], [0], [1], [0, 0, 1, 1], [], []>} : vector<1x128xf32>, vector<128x128xf32>, vector<1x128xf32> -> vector<1x128xf32>
      %c0_22 = arith.constant 0 : index
      %c0_23 = arith.constant 0 : index
      %32 = vector.load %arg8[%c0_22, %c0_23] : memref<1x128xf32, #tpu.memory_space<vmem>>, vector<1x128xf32>
      %33 = arith.addf %31, %32 : vector<1x128xf32>
      %c0_24 = arith.constant 0 : index
      %c0_25 = arith.constant 0 : index
      %c0_26 = arith.constant 0 : index
      %34 = vector.load %arg9[%c0_24, %c0_25, %c0_26] : memref<1x1x128xf32, #tpu.memory_space<vmem>>, vector<1x1x128xf32>
      %35 = vector.shape_cast %34 : vector<1x1x128xf32> to vector<1x128xf32>
      %36 = vector.shape_cast %33 : vector<1x128xf32> to vector<1x1x128xf32>
      tpu.vector_store %arg9[%c0_24, %c0_25, %c0_26], %36 {strides = array<i32>} : memref<1x1x128xf32, #tpu.memory_space<vmem>>, vector<1x1x128xf32>,
    } else {
    }
    return
  }
  func.func @transform_0(%arg0: i32, %arg1: i32, %arg2: i32) -> (i32, i32, i32) {
    %c0_i32 = arith.constant 0 : i32
    %c0_i32_0 = arith.constant 0 : i32
    return %arg0, %arg2, %c0_i32 : i32, i32, i32
  }
  func.func @transform_1(%arg0: i32, %arg1: i32, %arg2: i32) -> (i32, i32, i32) {
    %c0_i32 = arith.constant 0 : i32
    %c0_i32_0 = arith.constant 0 : i32
    %c0_i32_1 = arith.constant 0 : i32
    return %arg0, %c0_i32, %c0_i32_0 : i32, i32, i32
  }
  func.func @transform_2(%arg0: i32, %arg1: i32, %arg2: i32) -> (i32, i32, i32) {
    %c0_i32 = arith.constant 0 : i32
    %c0_i32_0 = arith.constant 0 : i32
    %c0_i32_1 = arith.constant 0 : i32
    return %arg1, %c0_i32, %c0_i32_0 : i32, i32, i32
  }
  func.func @transform_3(%arg0: i32, %arg1: i32, %arg2: i32) -> (i32, i32, i32) {
    %c0_i32 = arith.constant 0 : i32
    %c0_i32_0 = arith.constant 0 : i32
    %c0_i32_1 = arith.constant 0 : i32
    return %arg1, %c0_i32, %c0_i32_0 : i32, i32, i32
  }
  func.func @transform_4(%arg0: i32, %arg1: i32, %arg2: i32) -> (i32, i32) {
    %c0_i32 = arith.constant 0 : i32
    %c0_i32_0 = arith.constant 0 : i32
    %c0_i32_1 = arith.constant 0 : i32
    return %c0_i32, %c0_i32_0 : i32, i32
  }
  func.func @transform_5(%arg0: i32, %arg1: i32, %arg2: i32) -> (i32, i32) {
    %c0_i32 = arith.constant 0 : i32
    %c0_i32_0 = arith.constant 0 : i32
    %c0_i32_1 = arith.constant 0 : i32
    return %c0_i32, %c0_i32_0 : i32, i32
  }
  func.func @transform_6(%arg0: i32, %arg1: i32, %arg2: i32) -> (i32, i32, i32) {
    %c0_i32 = arith.constant 0 : i32
    %c0_i32_0 = arith.constant 0 : i32
    %c0_i32_1 = arith.constant 0 : i32
    return %arg0, %c0_i32, %c0_i32_0 : i32, i32, i32
  }
}

</mosaic_0001>

<llo_original>
// kernel: tpu_custom_call.1
$region0: #{tpu_custom_call.1}
  #allocation0 [shape = 'u32[]', space=smem, size = 0x4, offset = 0x4, fixed_abs, tag = 'smem constant byte address 0x4 - core index']
  #allocation1 [shape = 'u32[144,128]{1,0:T(1,128)}', space=vmem, size = 0x12000, scoped, tag = 'internal scratch']
  #allocation2 [shape = 'bf16[8,128]{1,0:T(8,128)(2,1)}', space=vmem, size = 0x800, scoped, tag = 'scratch operand']
  #allocation3 [shape = 'bf16[8,128]{1,0:T(8,128)(2,1)}', space=vmem, size = 0x800, scoped, tag = 'scratch operand']
  #allocation4 [shape = 'f32[1,128]{1,0:T(1,128)}', space=vmem, size = 0x200, scoped, tag = 'scratch operand']
  %s0 = inlined_call_operand.hbm [shape: bf16[2,8,8], index: 0, kind: input, shape index: {}]
  %s1 = inlined_call_operand.hbm [shape: bf16[2,8,128], index: 1, kind: input, shape index: {}]
  %s2 = inlined_call_operand.hbm [shape: bf16[3,128,128], index: 2, kind: input, shape index: {}]
  %s3 = inlined_call_operand.vmem [shape: f32[3,1,128], index: 3, kind: input, shape index: {}]
  %s4 = inlined_call_operand.hbm [shape: f32[128,128], index: 4, kind: input, shape index: {}]
  %s5 = inlined_call_operand.vmem [shape: f32[1,128], index: 5, kind: input, shape index: {}]
  %s6 = inlined_call_operand.hbm [shape: f32[2,1,128], index: 6, kind: output, shape index: {}]
  %s7 = sld [smem:[#allocation0]]
  $region93: #{tpu_custom_call.1} parent=0
    _
  %s9 = ssub.s32 1, %s7
  %s10 = scalar_select 0, %s9, %s7
  $region1: #{tpu_custom_call.1} parent=0
    #allocation5 [shape = 'u8[4096]{0}', space=vmem, size = 0x1000, scoped, tag = 'input window, operand 0']
    #allocation6 [shape = 's32[2]{0}', space=sflag, size = 0x8, scoped, tag = 'scoped memory for tpu_custom_call.1']
    #allocation7 [shape = 's32[2]{0}', space=sflag, size = 0x8, scoped, tag = 'scoped memory for tpu_custom_call.1']
    #allocation8 [shape = 'u8[4096]{0}', space=vmem, size = 0x1000, scoped, tag = 'input window, operand 1']
    #allocation9 [shape = 's32[2]{0}', space=sflag, size = 0x8, scoped, tag = 'scoped memory for tpu_custom_call.1']
    #allocation10 [shape = 'u8[65536]{0}', space=vmem, size = 0x10000, scoped, tag = 'input window, operand 2']
    #allocation11 [shape = 'u8[65536]{0}', space=vmem, size = 0x10000, scoped, tag = 'input window, operand 4, single buffered']
    #allocation12 [shape = 's32[1]{0}', space=sflag, size = 0x4, scoped, tag = 'scoped memory for tpu_custom_call.1']
    #allocation13 [shape = 'u8[1024]{0}', space=vmem, size = 0x400, scoped, tag = 'output window, operand 0']
    %11 = vsyncpa [#allocation6], 0
    %s12 = scalar_lea.sflag [#allocation6], 1
    %13 = vsyncpa %s12, 0
    %14 = vsyncpa [#allocation9], 0
    %s15 = scalar_lea.sflag [#allocation9], 1
    %16 = vsyncpa %s15, 0
    %17 = vsyncpa [#allocation12], 0
    %18 = vsyncpa [#allocation7], 0
    %s19 = scalar_lea.sflag [#allocation7], 1
    %20 = vsyncpa %s19, 0
    loop: start=0, step=1, limit=8
    $region2: #{tpu_custom_call.1} parent=1 // loop_pre_header
      _
    $region3: #{tpu_custom_call.1} parent=1 // loop_header
      %s22 = sphi 0, %s26
      %p23 = scmp.ge.s32.totalorder %s22, 8
      %s29 = sphi 0, %s48
      %s30 = sphi 0, %s44
      %s31 = sphi 0, %s40
      %s32 = sphi 0, %s29
      %s33 = sphi 0, %s30
      %s34 = sphi 0, %s31
      %s35 = sphi 0, %s32
      %s36 = sphi 0, %s33
      %s37 = sphi 0, %s34
      %s53 = sphi 0, %s55
      %s56 = sphi 0, %s53
      %s57 = sphi 0, %s56
      %s73 = sphi 0, %s57
      %s79 = sphi 0, %s81
      %s82 = sphi 0, %s79
      %s83 = sphi 0, %s82
      %s99 = sphi 0, %s83
      %s105 = sphi 0, %s107
      %s108 = sphi 0, %s105
      %s109 = sphi 0, %s108
      %s125 = sphi 0, %s109
      %s131 = sphi 0, %s133
      %s134 = sphi 0, %s131
      %s135 = sphi 0, %s134
      %s151 = sphi 0, %s135
      %s155 = sphi 0, %s155
      %s157 = sphi 0, %s155
      %s158 = sphi 0, %s157
      %s172 = sphi 0, %s158
      %s176 = sphi 0, %s176
      %s178 = sphi 0, %s176
      %s179 = sphi 0, %s178
      %s193 = sphi 0, %s179
      %s199 = sphi 0, %s201
      %s202 = sphi 0, %s199
      %s203 = sphi 0, %s202
      %s219 = sphi 0, %s203
    $region4: #{tpu_custom_call.1} parent=1 // loop_header_branch
      %25 = sbr.rel (%p23) target = $region8
    $region5: #{tpu_custom_call.1} parent=1 // loop_body
      %s27 = ssub.s32 %s22, 1
      %s28 = ssub.s32 %s22, 2
      %s38 = sadd.s32 1, %s31
      %p39 = scmp.ge.s32.totalorder %s38, 1
      %s40 = scalar_select %p39, 0, %s38
      %s41 = sadd.s32 1, %s30
      %s42 = scalar_select %p39, %s41, %s30
      %p43 = scmp.ge.s32.totalorder %s42, 3
      %s44 = scalar_select %p43, 0, %s42
      %s45 = sadd.s32 1, %s29
      %s46 = scalar_select %p43, %s45, %s29
      %p47 = scmp.ge.s32.totalorder %s46, 2
      %s48 = scalar_select %p47, 0, %s46
      %s49 = ssub.s32 %s29, %s48
      %s50 = ssub.s32 %s31, %s40
      %s51 = sor.u32 %s49, %s50
      %p52 = scmp.eq.s32.totalorder %s51, 0
      %s54 = sadd.s32 %s53, 1
      %s55 = scalar_select %p52, %s53, %s54
      %p58 = pneg %p52
      %p59 = scmp.eq.s32.totalorder %s22, 5
      %p60 = por %p58, %p59
      %p61 = scmp.ne.s32.totalorder %s53, %s56
      %p62 = scmp.eq.s32.totalorder %s22, 0
      %p63 = por %p61, %p62
      %p64 = scmp.ne.s32.totalorder %s53, %s56
      %p65 = scmp.eq.s32.totalorder %s27, 5
      %p66 = por %p64, %p65
      %p67 = scmp.ne.s32.totalorder %s56, %s57
      %p68 = scmp.eq.s32.totalorder %s27, 0
      %p69 = por %p67, %p68
      %p70 = scmp.ne.s32.totalorder %s56, %s57
      %p71 = scmp.eq.s32.totalorder %s28, 5
      %p72 = por %p70, %p71
      %p74 = scmp.ne.s32.totalorder %s57, %s73
      %p75 = scmp.eq.s32.totalorder %s28, 0
      %p76 = por %p74, %p75
      %s77 = ssub.s32 %s29, %s48
      %p78 = scmp.eq.s32.totalorder %s77, 0
      %s80 = sadd.s32 %s79, 1
      %s81 = scalar_select %p78, %s79, %s80
      %p84 = pneg %p78
      %p85 = scmp.eq.s32.totalorder %s22, 5
      %p86 = por %p84, %p85
      %p87 = scmp.ne.s32.totalorder %s79, %s82
      %p88 = scmp.eq.s32.totalorder %s22, 0
      %p89 = por %p87, %p88
      %p90 = scmp.ne.s32.totalorder %s79, %s82
      %p91 = scmp.eq.s32.totalorder %s27, 5
      %p92 = por %p90, %p91
      %p93 = scmp.ne.s32.totalorder %s82, %s83
      %p94 = scmp.eq.s32.totalorder %s27, 0
      %p95 = por %p93, %p94
      %p96 = scmp.ne.s32.totalorder %s82, %s83
      %p97 = scmp.eq.s32.totalorder %s28, 5
      %p98 = por %p96, %p97
      %p100 = scmp.ne.s32.totalorder %s83, %s99
      %p101 = scmp.eq.s32.totalorder %s28, 0
      %p102 = por %p100, %p101
      %s103 = ssub.s32 %s30, %s44
      %p104 = scmp.eq.s32.totalorder %s103, 0
      %s106 = sadd.s32 %s105, 1
      %s107 = scalar_select %p104, %s105, %s106
      %p110 = pneg %p104
      %p111 = scmp.eq.s32.totalorder %s22, 5
      %p112 = por %p110, %p111
      %p113 = scmp.ne.s32.totalorder %s105, %s108
      %p114 = scmp.eq.s32.totalorder %s22, 0
      %p115 = por %p113, %p114
      %p116 = scmp.ne.s32.totalorder %s105, %s108
      %p117 = scmp.eq.s32.totalorder %s27, 5
      %p118 = por %p116, %p117
      %p119 = scmp.ne.s32.totalorder %s108, %s109
      %p120 = scmp.eq.s32.totalorder %s27, 0
      %p121 = por %p119, %p120
      %p122 = scmp.ne.s32.totalorder %s108, %s109
      %p123 = scmp.eq.s32.totalorder %s28, 5
      %p124 = por %p122, %p123
      %p126 = scmp.ne.s32.totalorder %s109, %s125
      %p127 = scmp.eq.s32.totalorder %s28, 0
      %p128 = por %p126, %p127
      %s129 = ssub.s32 %s30, %s44
      %p130 = scmp.eq.s32.totalorder %s129, 0
      %s132 = sadd.s32 %s131, 1
      %s133 = scalar_select %p130, %s131, %s132
      %p136 = pneg %p130
      %p137 = scmp.eq.s32.totalorder %s22, 5
      %p138 = por %p136, %p137
      %p139 = scmp.ne.s32.totalorder %s131, %s134
      %p140 = scmp.eq.s32.totalorder %s22, 0
      %p141 = por %p139, %p140
      %p142 = scmp.ne.s32.totalorder %s131, %s134
      %p143 = scmp.eq.s32.totalorder %s27, 5
      %p144 = por %p142, %p143
      %p145 = scmp.ne.s32.totalorder %s134, %s135
      %p146 = scmp.eq.s32.totalorder %s27, 0
      %p147 = por %p145, %p146
      %p148 = scmp.ne.s32.totalorder %s134, %s135
      %p149 = scmp.eq.s32.totalorder %s28, 5
      %p150 = por %p148, %p149
      %p152 = scmp.ne.s32.totalorder %s135, %s151
      %p153 = scmp.eq.s32.totalorder %s28, 0
      %p154 = por %p152, %p153
      %s156 = sadd.s32 %s155, 1
      %p159 = scmp.eq.s32.totalorder %s22, 5
      %p160 = scmp.ne.s32.totalorder %s155, %s157
      %p161 = scmp.eq.s32.totalorder %s22, 0
      %p162 = por %p160, %p161
      %p163 = scmp.ne.s32.totalorder %s155, %s157
      %p164 = scmp.eq.s32.totalorder %s27, 5
      %p165 = por %p163, %p164
      %p166 = scmp.ne.s32.totalorder %s157, %s158
      %p167 = scmp.eq.s32.totalorder %s27, 0
      %p168 = por %p166, %p167
      %p169 = scmp.ne.s32.totalorder %s157, %s158
      %p170 = scmp.eq.s32.totalorder %s28, 5
      %p171 = por %p169, %p170
      %p173 = scmp.ne.s32.totalorder %s158, %s172
      %p174 = scmp.eq.s32.totalorder %s28, 0
      %p175 = por %p173, %p174
      %s177 = sadd.s32 %s176, 1
      %p180 = scmp.eq.s32.totalorder %s22, 5
      %p181 = scmp.ne.s32.totalorder %s176, %s178
      %p182 = scmp.eq.s32.totalorder %s22, 0
      %p183 = por %p181, %p182
      %p184 = scmp.ne.s32.totalorder %s176, %s178
      %p185 = scmp.eq.s32.totalorder %s27, 5
      %p186 = por %p184, %p185
      %p187 = scmp.ne.s32.totalorder %s178, %s179
      %p188 = scmp.eq.s32.totalorder %s27, 0
      %p189 = por %p187, %p188
      %p190 = scmp.ne.s32.totalorder %s178, %s179
      %p191 = scmp.eq.s32.totalorder %s28, 5
      %p192 = por %p190, %p191
      %p194 = scmp.ne.s32.totalorder %s179, %s193
      %p195 = scmp.eq.s32.totalorder %s28, 0
      %p196 = por %p194, %p195
      %s197 = ssub.s32 %s29, %s48
      %p198 = scmp.eq.s32.totalorder %s197, 0
      %s200 = sadd.s32 %s199, 1
      %s201 = scalar_select %p198, %s199, %s200
      %p204 = pneg %p198
      %p205 = scmp.eq.s32.totalorder %s22, 5
      %p206 = por %p204, %p205
      %p207 = scmp.ne.s32.totalorder %s199, %s202
      %p208 = scmp.eq.s32.totalorder %s22, 0
      %p209 = por %p207, %p208
      %p210 = scmp.ne.s32.totalorder %s199, %s202
      %p211 = scmp.eq.s32.totalorder %s27, 5
      %p212 = por %p210, %p211
      %p213 = scmp.ne.s32.totalorder %s202, %s203
      %p214 = scmp.eq.s32.totalorder %s27, 0
      %p215 = por %p213, %p214
      %p216 = scmp.ne.s32.totalorder %s202, %s203
      %p217 = scmp.eq.s32.totalorder %s28, 5
      %p218 = por %p216, %p217
      %p220 = scmp.ne.s32.totalorder %s203, %s219
      %p221 = scmp.eq.s32.totalorder %s28, 0
      %p222 = por %p220, %p221
      %p223 = scmp.le.s32.totalorder 1, %s22
      %p224 = scmp.lt.s32.totalorder %s22, 7
      %p225 = pnand %p223, %p224
      %p226 = pneg %p225
      // Predicated region
      $region9: #{tpu_custom_call.1} parent=5 // pred_check
        _
      $region10: #{tpu_custom_call.1} parent=5 // pred_check_branch
        %228 = sbr.rel (%p225) target = $region12
      $region11: #{tpu_custom_call.1} parent=5 // pred_region
        %s229 = ssub.s32 %s22, 1
        // Predicated region
        $region13: #{tpu_custom_call.1} parent=11 // pred_check
          %p230 = pneg %p168
        $region14: #{tpu_custom_call.1} parent=11 // pred_check_branch
          %232 = sbr.rel (%p230) target = $region16
        $region15: #{tpu_custom_call.1} parent=11 // pred_region
          %s234 = ssub.s32 2048, 2048
          %235 = vsyncadd [#allocation12], %s234
          %s236 = sshll.u32 [#allocation11], 4
          %s237 = int_to_ptr.vmem [resolvable:$true] %s236
          %242 = dma.hbm_to_vmem [thread:$0]  %s4, 2048, %s237, [#allocation12], 128, 128, 8
        $region16: #{tpu_custom_call.1} parent=11 // pred_fallthru
          _
        // Predicated region
        $region17: #{tpu_custom_call.1} parent=11 // pred_check
          %p243 = pneg %p189
        $region18: #{tpu_custom_call.1} parent=11 // pred_check_branch
          %245 = sbr.rel (%p243) target = $region20
        $region19: #{tpu_custom_call.1} parent=11 // pred_region
          _
        $region20: #{tpu_custom_call.1} parent=11 // pred_fallthru
          _
      $region12: #{tpu_custom_call.1} parent=5 // pred_fallthru
        _
      %p246 = scmp.lt.s32.totalorder %s22, 6
      // Predicated region
      $region21: #{tpu_custom_call.1} parent=5 // pred_check
        %p247 = pneg %p246
      $region22: #{tpu_custom_call.1} parent=5 // pred_check_branch
        %249 = sbr.rel (%p247) target = $region24
      $region23: #{tpu_custom_call.1} parent=5 // pred_region
        // Predicated region
        $region25: #{tpu_custom_call.1} parent=23 // pred_check
          %p250 = pneg %p63
        $region26: #{tpu_custom_call.1} parent=23 // pred_check_branch
          %252 = sbr.rel (%p250) target = $region28
        $region27: #{tpu_custom_call.1} parent=23 // pred_region
          %s253 = sand.u32 %s53, 1
          %s254 = scalar_lea.sflag [#allocation6], %s253
          %s255 = sand.u32 %s53, 1
          %s256 = smul.addr %s255, 4
          %s257 = scalar_lea.vmem [#allocation5], %s256
          %s259 = ssub.s32 64, 64
          %260 = vsyncadd %s254, %s259
          %s261 = sadd.s32 %s31, %s29
          %s262 = smul.addr %s261, 64
          %s263 = scalar_lea.hbm %s0, %s262
          %s265 = sshll.u32 %s257, 4
          %s266 = int_to_ptr.vmem [resolvable:$true] %s265
          %268 = dma.hbm_to_vmem [thread:$0]  %s263, 64, %s266, %s254
        $region28: #{tpu_custom_call.1} parent=23 // pred_fallthru
          _
        // Predicated region
        $region29: #{tpu_custom_call.1} parent=23 // pred_check
          %p269 = pneg %p89
        $region30: #{tpu_custom_call.1} parent=23 // pred_check_branch
          %271 = sbr.rel (%p269) target = $region32
        $region31: #{tpu_custom_call.1} parent=23 // pred_region
          %s272 = sand.u32 %s22, 1
          %s273 = scalar_lea.sflag [#allocation9], %s272
          %s274 = sand.u32 %s79, 1
          %s275 = smul.addr %s274, 4
          %s276 = scalar_lea.vmem [#allocation8], %s275
          %s278 = ssub.s32 64, 64
          %279 = vsyncadd %s273, %s278
          %s280 = smul.addr %s29, 64
          %s281 = scalar_lea.hbm %s1, %s280
          %s283 = sshll.u32 %s276, 4
          %s284 = int_to_ptr.vmem [resolvable:$true] %s283
          %286 = dma.hbm_to_vmem [thread:$0]  %s281, 64, %s284, %s273
        $region32: #{tpu_custom_call.1} parent=23 // pred_fallthru
          _
        // Predicated region
        $region33: #{tpu_custom_call.1} parent=23 // pred_check
          %p287 = pneg %p115
        $region34: #{tpu_custom_call.1} parent=23 // pred_check_branch
          %289 = sbr.rel (%p287) target = $region36
        $region35: #{tpu_custom_call.1} parent=23 // pred_region
          %s290 = sand.u32 %s22, 1
          %s291 = scalar_lea.sflag [#allocation9], %s290
          %s292 = sand.u32 %s105, 1
          %s293 = smul.addr %s292, 64
          %s294 = scalar_lea.vmem [#allocation10], %s293
          %s296 = ssub.s32 1024, 1024
          %297 = vsyncadd %s291, %s296
          %s298 = smul.addr %s30, 16
          %s299 = smul.addr %s298, 64
          %s300 = scalar_lea.hbm %s2, %s299
          %s301 = sshll.u32 %s294, 4
          %s302 = int_to_ptr.vmem [resolvable:$true] %s301
          %307 = dma.hbm_to_vmem [thread:$0]  %s300, 1024, %s302, %s291, 64, 64, 4
        $region36: #{tpu_custom_call.1} parent=23 // pred_fallthru
          _
        // Predicated region
        $region37: #{tpu_custom_call.1} parent=23 // pred_check
          %p308 = pneg %p141
        $region38: #{tpu_custom_call.1} parent=23 // pred_check_branch
          %310 = sbr.rel (%p308) target = $region40
        $region39: #{tpu_custom_call.1} parent=23 // pred_region
          %p311 = scmp.lt.s32.totalorder %s30, 2
          %s312 = scalar_select %p311, %s30, 2
          %s313 = scalar_lea.vmem %s3, %s312
        $region40: #{tpu_custom_call.1} parent=23 // pred_fallthru
          _
      $region24: #{tpu_custom_call.1} parent=5 // pred_fallthru
        _
      %p314 = scmp.le.s32.totalorder 1, %s22
      %p315 = scmp.lt.s32.totalorder %s22, 7
      %p316 = pnand %p314, %p315
      %p317 = pneg %p316
      // Predicated region
      $region41: #{tpu_custom_call.1} parent=5 // pred_check
        _
      $region42: #{tpu_custom_call.1} parent=5 // pred_check_branch
        %319 = sbr.rel (%p316) target = $region44
      $region43: #{tpu_custom_call.1} parent=5 // pred_region
        %s320 = ssub.s32 %s22, 1
        %s321 = sand.u32 %s56, 1
        %s322 = scalar_lea.sflag [#allocation6], %s321
        %s323 = sand.u32 %s56, 1
        %s324 = smul.addr %s323, 4
        %s325 = scalar_lea.vmem [#allocation5], %s324
        // Predicated region
        $region45: #{tpu_custom_call.1} parent=43 // pred_check
          %p326 = pneg %p69
        $region46: #{tpu_custom_call.1} parent=43 // pred_check_branch
          %328 = sbr.rel (%p326) target = $region48
        $region47: #{tpu_custom_call.1} parent=43 // pred_region
          %329 = dma.done %s322, 64
        $region48: #{tpu_custom_call.1} parent=43 // pred_fallthru
          _
        %s330 = sand.u32 %s27, 1
        %s331 = scalar_lea.sflag [#allocation9], %s330
        %s332 = sand.u32 %s82, 1
        %s333 = smul.addr %s332, 4
        %s334 = scalar_lea.vmem [#allocation8], %s333
        // Predicated region
        $region49: #{tpu_custom_call.1} parent=43 // pred_check
          %p335 = pneg %p95
        $region50: #{tpu_custom_call.1} parent=43 // pred_check_branch
          %337 = sbr.rel (%p335) target = $region52
        $region51: #{tpu_custom_call.1} parent=43 // pred_region
          %338 = dma.done %s331, 64
        $region52: #{tpu_custom_call.1} parent=43 // pred_fallthru
          _
        %s339 = sand.u32 %s27, 1
        %s340 = scalar_lea.sflag [#allocation9], %s339
        %s341 = sand.u32 %s108, 1
        %s342 = smul.addr %s341, 64
        %s343 = scalar_lea.vmem [#allocation10], %s342
        // Predicated region
        $region53: #{tpu_custom_call.1} parent=43 // pred_check
          %p344 = pneg %p121
        $region54: #{tpu_custom_call.1} parent=43 // pred_check_branch
          %346 = sbr.rel (%p344) target = $region56
        $region55: #{tpu_custom_call.1} parent=43 // pred_region
          %347 = dma.done %s340, 1024
        $region56: #{tpu_custom_call.1} parent=43 // pred_fallthru
          _
        // Predicated region
        $region57: #{tpu_custom_call.1} parent=43 // pred_check
          %p348 = pneg %p168
        $region58: #{tpu_custom_call.1} parent=43 // pred_check_branch
          %350 = sbr.rel (%p348) target = $region60
        $region59: #{tpu_custom_call.1} parent=43 // pred_region
          %351 = dma.done [#allocation12], 2048
        $region60: #{tpu_custom_call.1} parent=43 // pred_fallthru
          _
        %s352 = sand.u32 %s56, 1
        %s353 = scalar_lea.sflag [#allocation6], %s352
        %s354 = sand.u32 %s56, 1
        %s355 = smul.addr %s354, 4
        %s356 = scalar_lea.vmem [#allocation5], %s355
        %p357 = pneg %p69
        %p358 = pneg %p66
        %s359 = sand.u32 %s27, 1
        %s360 = scalar_lea.sflag [#allocation9], %s359
        %s361 = sand.u32 %s82, 1
        %s362 = smul.addr %s361, 4
        %s363 = scalar_lea.vmem [#allocation8], %s362
        %p364 = pneg %p95
        %p365 = pneg %p92
        %s366 = sand.u32 %s27, 1
        %s367 = scalar_lea.sflag [#allocation9], %s366
        %s368 = sand.u32 %s108, 1
        %s369 = smul.addr %s368, 64
        %s370 = scalar_lea.vmem [#allocation10], %s369
        %p371 = pneg %p121
        %p372 = pneg %p118
        %p373 = scmp.lt.s32.totalorder %s33, 2
        %s374 = scalar_select %p373, %s33, 2
        %s375 = scalar_lea.vmem %s3, %s374
        %p376 = pneg %p147
        %p377 = pneg %p144
        %p378 = pneg %p168
        %p379 = pneg %p165
        %p380 = pneg %p189
        %p381 = pneg %p186
        %p382 = pneg %p215
        %p383 = pneg %p212
        %s384 = sand.u32 %s202, 1
        %s385 = scalar_lea.sflag [#allocation7], %s384
        %s386 = sand.u32 %s202, 1
        %s387 = scalar_lea.vmem [#allocation13], %s386
        %p388 = scmp.lt.s32.totalorder %s33, 2
        %s389 = scalar_select %p388, %s33, 2
        %s390 = scalar_lea.vmem %s3, %s389
        %s392 = smul.u32 %s34, 8
        %v393 = vld [vmem:[%s325] sm:$0xf]
        %v394 = vld [vmem:[%s343] sm:$0xf]
        %v395 = vld [vmem:[%s343 + $0x4] sm:$0xf]
        %v396 = vld [vmem:[%s343 + $0x8] sm:$0xf]
        %v397 = vld [vmem:[%s343 + $0xc] sm:$0xf]
        %v398 = vld [vmem:[%s343 + $0x10] sm:$0xf]
        %v399 = vld [vmem:[%s343 + $0x14] sm:$0xf]
        %v400 = vld [vmem:[%s343 + $0x18] sm:$0xf]
        %v401 = vld [vmem:[%s343 + $0x1c] sm:$0xf]
        %v402 = vld [vmem:[%s343 + $0x20] sm:$0xf]
        %v403 = vld [vmem:[%s343 + $0x24] sm:$0xf]
        %v404 = vld [vmem:[%s343 + $0x28] sm:$0xf]
        %v405 = vld [vmem:[%s343 + $0x2c] sm:$0xf]
        %v406 = vld [vmem:[%s343 + $0x30] sm:$0xf]
        %v407 = vld [vmem:[%s343 + $0x34] sm:$0xf]
        %v408 = vld [vmem:[%s343 + $0x38] sm:$0xf]
        %v409 = vld [vmem:[%s343 + $0x3c] sm:$0xf]
        %v410 = vld [vmem:[%s390] sm:$0x1]
        %p411 = scmp.eq.s32.totalorder %s33, 2
        %p412 = scmp.eq.s32.totalorder %s34, 0
        %p413 = pnand %p411, %p412
        %p414 = pneg %p413
        // Predicated region
        $region61: #{tpu_custom_call.1} parent=43 // pred_check
          _
        $region62: #{tpu_custom_call.1} parent=43 // pred_check_branch
          %416 = sbr.rel (%p413) target = $region64
        $region63: #{tpu_custom_call.1} parent=43 // pred_region
          %417 = vst [vmem:[#allocation4] sm:$0x1] 0.0
        $region64: #{tpu_custom_call.1} parent=43 // pred_fallthru
          _
        %p418 = scmp.eq.s32.totalorder %s33, 0
        // Predicated region
        $region65: #{tpu_custom_call.1} parent=43 // pred_check
          %p419 = pneg %p418
        $region66: #{tpu_custom_call.1} parent=43 // pred_check_branch
          %421 = sbr.rel (%p419) target = $region68
        $region67: #{tpu_custom_call.1} parent=43 // pred_region
          %v422 = vld [vmem:[%s334] sm:$0xf]
          %vm423 = vcmask 64512
          %v425 = vsel %vm423, %v393, 0
          %vm427 = vcmask 1043456
          %v429 = vsel %vm427, %v422, 0
          %431 = vmatprep.subr.bf16.mxu0 0
          %432 = vmatpush1.bf16.msra.mxu0 0
          %433 = vmatprep.subr.bf16.mxu0 0
          %434 = vmatpush1.bf16.msra.mxu0 0
          %435 = vmatprep.subr.bf16.mxu0 0
          %436 = vmatpush1.bf16.msra.mxu0 0
          %437 = vmatprep.subr.bf16.mxu0 0
          %438 = vmatpush1.bf16.msra.mxu0 0
          %439 = vmatprep.subr.bf16.mxu0 0
          %440 = vmatpush1.bf16.msra.mxu0 0
          %441 = vmatprep.subr.bf16.mxu0 0
          %442 = vmatpush1.bf16.msra.mxu0 0
          %443 = vmatprep.subr.bf16.mxu0 0
          %444 = vmatpush1.bf16.msra.mxu0 0
          %445 = vmatprep.subr.bf16.mxu0 0
          %446 = vmatpush1.bf16.msra.mxu0 %v429
          %447 = vmatprep.subr.bf16.mxu0 0
          %448 = vmatpush2.bf16.msra.mxu0 0
          %449 = vmatprep.subr.bf16.mxu0 0
          %450 = vmatpush2.bf16.msra.mxu0 0
          %451 = vmatprep.subr.bf16.mxu0 0
          %452 = vmatpush2.bf16.msra.mxu0 0
          %453 = vmatprep.subr.bf16.mxu0 0
          %454 = vmatpush2.bf16.msra.mxu0 0
          %455 = vmatprep.subr.bf16.mxu0 0
          %456 = vmatpush2.bf16.msra.mxu0 0
          %457 = vmatprep.subr.bf16.mxu0 0
          %458 = vmatpush2.bf16.msra.mxu0 0
          %459 = vmatprep.subr.bf16.mxu0 0
          %460 = vmatpush2.bf16.msra.mxu0 0
          %461 = vmatprep.subr.bf16.mxu0 0
          %462 = vmatpush2.bf16.msra.mxu0 0
          %463 = vmatprep.mubr.bf16.mxu0 0
          %464 = vmatmul.mubr.bf16.gmra.mxu0 %v425
          %v465 = vpop.f32.mrf.mxu0
          %v466 = vadd.f32 0.0, %v465
          %v467 = vpop.f32.mrf.mxu0
          %v468 = vpop.f32.mrf.mxu0
          %v469 = vpop.f32.mrf.mxu0
          %470 = vdwg.mxu0
          %v471 = vpack.c.bf16 %v466, %v466
          %v473 = vlaneseq
          %v474 = vshrl.u32 %v473, 7
          %v475 = vsub.s32 0, %v474
          %v476 = vrot.slane %v410, %v475
          %v494 = vunpack.c.l.b16 %v394
          %v495 = vunpack.c.l.b16 %v395
          %v496 = vunpack.c.l.b16 %v396
          %v497 = vunpack.c.l.b16 %v397
          %v498 = vunpack.c.l.b16 %v398
          %v499 = vunpack.c.l.b16 %v399
          %v500 = vunpack.c.l.b16 %v400
          %v501 = vunpack.c.l.b16 %v401
          %v502 = vunpack.c.l.b16 %v402
          %v503 = vunpack.c.l.b16 %v403
          %v504 = vunpack.c.l.b16 %v404
          %v505 = vunpack.c.l.b16 %v405
          %v506 = vunpack.c.l.b16 %v406
          %v507 = vunpack.c.l.b16 %v407
          %v508 = vunpack.c.l.b16 %v408
          %v509 = vunpack.c.l.b16 %v409
          %v510 = vpack.c.b16 %v495, %v494
          %v511 = vpack.c.b16 %v497, %v496
          %v512 = vpack.c.b16 %v499, %v498
          %v513 = vpack.c.b16 %v501, %v500
          %v514 = vpack.c.b16 %v503, %v502
          %v515 = vpack.c.b16 %v505, %v504
          %v516 = vpack.c.b16 %v507, %v506
          %v517 = vpack.c.b16 %v509, %v508
          %526 = vmatprep.subr.bf16.mxu0 0
          %527 = vmatpush1.bf16.msra.mxu0 %v517
          %528 = vmatprep.subr.bf16.mxu0 0
          %529 = vmatpush1.bf16.msra.mxu0 %v516
          %530 = vmatprep.subr.bf16.mxu0 0
          %531 = vmatpush1.bf16.msra.mxu0 %v515
          %532 = vmatprep.subr.bf16.mxu0 0
          %533 = vmatpush1.bf16.msra.mxu0 %v514
          %534 = vmatprep.subr.bf16.mxu0 0
          %535 = vmatpush1.bf16.msra.mxu0 %v513
          %536 = vmatprep.subr.bf16.mxu0 0
          %537 = vmatpush1.bf16.msra.mxu0 %v512
          %538 = vmatprep.subr.bf16.mxu0 0
          %539 = vmatpush1.bf16.msra.mxu0 %v511
          %540 = vmatprep.subr.bf16.mxu0 0
          %541 = vmatpush1.bf16.msra.mxu0 %v510
          %542 = vmatprep.subr.bf16.mxu0 0
          %543 = vmatpush2.bf16.msra.mxu0 0
          %544 = vmatprep.subr.bf16.mxu0 0
          %545 = vmatpush2.bf16.msra.mxu0 0
          %546 = vmatprep.subr.bf16.mxu0 0
          %547 = vmatpush2.bf16.msra.mxu0 0
          %548 = vmatprep.subr.bf16.mxu0 0
          %549 = vmatpush2.bf16.msra.mxu0 0
          %550 = vmatprep.subr.bf16.mxu0 0
          %551 = vmatpush2.bf16.msra.mxu0 0
          %552 = vmatprep.subr.bf16.mxu0 0
          %553 = vmatpush2.bf16.msra.mxu0 0
          %554 = vmatprep.subr.bf16.mxu0 0
          %555 = vmatpush2.bf16.msra.mxu0 0
          %556 = vmatprep.subr.bf16.mxu0 0
          %557 = vmatpush2.bf16.msra.mxu0 0
          %558 = vmatprep.mubr.bf16.mxu0 0
          %559 = vmatmul.mubr.bf16.gmra.mxu0 %v471
          %v560 = vpop.f32.mrf.mxu0
          %v561 = vadd.f32 %v476, %v560
          %v562 = vpop.f32.mrf.mxu0
          %v563 = vpop.f32.mrf.mxu0
          %v564 = vpop.f32.mrf.mxu0
          %565 = vdwg.mxu0
          %v566 = vmax.f32 %v561, 0.0
          %v567 = vpack.c.bf16 %v566, %v566
          %s568 = sshra.s32 %s392, 3
          %s569 = sand.u32 %s392, 7
          %s570 = smul.addr %s568, 4
          %s571 = scalar_lea.vmem [#allocation2], %s570
          %572 = vst [vmem:[%s571] sm:$0xf] %v567
        $region68: #{tpu_custom_call.1} parent=43 // pred_fallthru
          _
        %p573 = scmp.eq.s32.totalorder %s33, 1
        // Predicated region
        $region69: #{tpu_custom_call.1} parent=43 // pred_check
          %p574 = pneg %p573
        $region70: #{tpu_custom_call.1} parent=43 // pred_check_branch
          %576 = sbr.rel (%p574) target = $region72
        $region71: #{tpu_custom_call.1} parent=43 // pred_region
          %v577 = vld [vmem:[#allocation2] sm:$0xf]
          %vm578 = vcmask 64512
          %v580 = vsel %vm578, %v393, 0
          %vm582 = vcmask 1043456
          %v584 = vsel %vm582, %v577, 0
          %586 = vmatprep.subr.bf16.mxu0 0
          %587 = vmatpush1.bf16.msra.mxu0 0
          %588 = vmatprep.subr.bf16.mxu0 0
          %589 = vmatpush1.bf16.msra.mxu0 0
          %590 = vmatprep.subr.bf16.mxu0 0
          %591 = vmatpush1.bf16.msra.mxu0 0
          %592 = vmatprep.subr.bf16.mxu0 0
          %593 = vmatpush1.bf16.msra.mxu0 0
          %594 = vmatprep.subr.bf16.mxu0 0
          %595 = vmatpush1.bf16.msra.mxu0 0
          %596 = vmatprep.subr.bf16.mxu0 0
          %597 = vmatpush1.bf16.msra.mxu0 0
          %598 = vmatprep.subr.bf16.mxu0 0
          %599 = vmatpush1.bf16.msra.mxu0 0
          %600 = vmatprep.subr.bf16.mxu0 0
          %601 = vmatpush1.bf16.msra.mxu0 %v584
          %602 = vmatprep.subr.bf16.mxu0 0
          %603 = vmatpush2.bf16.msra.mxu0 0
          %604 = vmatprep.subr.bf16.mxu0 0
          %605 = vmatpush2.bf16.msra.mxu0 0
          %606 = vmatprep.subr.bf16.mxu0 0
          %607 = vmatpush2.bf16.msra.mxu0 0
          %608 = vmatprep.subr.bf16.mxu0 0
          %609 = vmatpush2.bf16.msra.mxu0 0
          %610 = vmatprep.subr.bf16.mxu0 0
          %611 = vmatpush2.bf16.msra.mxu0 0
          %612 = vmatprep.subr.bf16.mxu0 0
          %613 = vmatpush2.bf16.msra.mxu0 0
          %614 = vmatprep.subr.bf16.mxu0 0
          %615 = vmatpush2.bf16.msra.mxu0 0
          %616 = vmatprep.subr.bf16.mxu0 0
          %617 = vmatpush2.bf16.msra.mxu0 0
          %618 = vmatprep.mubr.bf16.mxu0 0
          %619 = vmatmul.mubr.bf16.gmra.mxu0 %v580
          %v620 = vpop.f32.mrf.mxu0
          %v621 = vadd.f32 0.0, %v620
          %v622 = vpop.f32.mrf.mxu0
          %v623 = vpop.f32.mrf.mxu0
          %v624 = vpop.f32.mrf.mxu0
          %625 = vdwg.mxu0
          %v626 = vpack.c.bf16 %v621, %v621
          %v628 = vlaneseq
          %v629 = vshrl.u32 %v628, 7
          %v630 = vsub.s32 0, %v629
          %v631 = vrot.slane %v410, %v630
          %v649 = vunpack.c.l.b16 %v394
          %v650 = vunpack.c.l.b16 %v395
          %v651 = vunpack.c.l.b16 %v396
          %v652 = vunpack.c.l.b16 %v397
          %v653 = vunpack.c.l.b16 %v398
          %v654 = vunpack.c.l.b16 %v399
          %v655 = vunpack.c.l.b16 %v400
          %v656 = vunpack.c.l.b16 %v401
          %v657 = vunpack.c.l.b16 %v402
          %v658 = vunpack.c.l.b16 %v403
          %v659 = vunpack.c.l.b16 %v404
          %v660 = vunpack.c.l.b16 %v405
          %v661 = vunpack.c.l.b16 %v406
          %v662 = vunpack.c.l.b16 %v407
          %v663 = vunpack.c.l.b16 %v408
          %v664 = vunpack.c.l.b16 %v409
          %v665 = vpack.c.b16 %v650, %v649
          %v666 = vpack.c.b16 %v652, %v651
          %v667 = vpack.c.b16 %v654, %v653
          %v668 = vpack.c.b16 %v656, %v655
          %v669 = vpack.c.b16 %v658, %v657
          %v670 = vpack.c.b16 %v660, %v659
          %v671 = vpack.c.b16 %v662, %v661
          %v672 = vpack.c.b16 %v664, %v663
          %681 = vmatprep.subr.bf16.mxu0 0
          %682 = vmatpush1.bf16.msra.mxu0 %v672
          %683 = vmatprep.subr.bf16.mxu0 0
          %684 = vmatpush1.bf16.msra.mxu0 %v671
          %685 = vmatprep.subr.bf16.mxu0 0
          %686 = vmatpush1.bf16.msra.mxu0 %v670
          %687 = vmatprep.subr.bf16.mxu0 0
          %688 = vmatpush1.bf16.msra.mxu0 %v669
          %689 = vmatprep.subr.bf16.mxu0 0
          %690 = vmatpush1.bf16.msra.mxu0 %v668
          %691 = vmatprep.subr.bf16.mxu0 0
          %692 = vmatpush1.bf16.msra.mxu0 %v667
          %693 = vmatprep.subr.bf16.mxu0 0
          %694 = vmatpush1.bf16.msra.mxu0 %v666
          %695 = vmatprep.subr.bf16.mxu0 0
          %696 = vmatpush1.bf16.msra.mxu0 %v665
          %697 = vmatprep.subr.bf16.mxu0 0
          %698 = vmatpush2.bf16.msra.mxu0 0
          %699 = vmatprep.subr.bf16.mxu0 0
          %700 = vmatpush2.bf16.msra.mxu0 0
          %701 = vmatprep.subr.bf16.mxu0 0
          %702 = vmatpush2.bf16.msra.mxu0 0
          %703 = vmatprep.subr.bf16.mxu0 0
          %704 = vmatpush2.bf16.msra.mxu0 0
          %705 = vmatprep.subr.bf16.mxu0 0
          %706 = vmatpush2.bf16.msra.mxu0 0
          %707 = vmatprep.subr.bf16.mxu0 0
          %708 = vmatpush2.bf16.msra.mxu0 0
          %709 = vmatprep.subr.bf16.mxu0 0
          %710 = vmatpush2.bf16.msra.mxu0 0
          %711 = vmatprep.subr.bf16.mxu0 0
          %712 = vmatpush2.bf16.msra.mxu0 0
          %713 = vmatprep.mubr.bf16.mxu0 0
          %714 = vmatmul.mubr.bf16.gmra.mxu0 %v626
          %v715 = vpop.f32.mrf.mxu0
          %v716 = vadd.f32 %v631, %v715
          %v717 = vpop.f32.mrf.mxu0
          %v718 = vpop.f32.mrf.mxu0
          %v719 = vpop.f32.mrf.mxu0
          %720 = vdwg.mxu0
          %v721 = vmax.f32 %v716, 0.0
          %v722 = vpack.c.bf16 %v721, %v721
          %s723 = sshra.s32 %s392, 3
          %s724 = sand.u32 %s392, 7
          %s725 = smul.addr %s723, 4
          %s726 = scalar_lea.vmem [#allocation3], %s725
          %727 = vst [vmem:[%s726] sm:$0xf] %v722
        $region72: #{tpu_custom_call.1} parent=43 // pred_fallthru
          _
        // Predicated region
        $region73: #{tpu_custom_call.1} parent=43 // pred_check
          %p728 = pneg %p411
        $region74: #{tpu_custom_call.1} parent=43 // pred_check_branch
          %730 = sbr.rel (%p728) target = $region76
        $region75: #{tpu_custom_call.1} parent=43 // pred_region
          %v731 = vld [vmem:[#allocation3] sm:$0xf]
          %vm732 = vcmask 64512
          %v734 = vsel %vm732, %v393, 0
          %vm736 = vcmask 1043456
          %v738 = vsel %vm736, %v731, 0
          %740 = vmatprep.subr.bf16.mxu0 0
          %741 = vmatpush1.bf16.msra.mxu0 0
          %742 = vmatprep.subr.bf16.mxu0 0
          %743 = vmatpush1.bf16.msra.mxu0 0
          %744 = vmatprep.subr.bf16.mxu0 0
          %745 = vmatpush1.bf16.msra.mxu0 0
          %746 = vmatprep.subr.bf16.mxu0 0
          %747 = vmatpush1.bf16.msra.mxu0 0
          %748 = vmatprep.subr.bf16.mxu0 0
          %749 = vmatpush1.bf16.msra.mxu0 0
          %750 = vmatprep.subr.bf16.mxu0 0
          %751 = vmatpush1.bf16.msra.mxu0 0
          %752 = vmatprep.subr.bf16.mxu0 0
          %753 = vmatpush1.bf16.msra.mxu0 0
          %754 = vmatprep.subr.bf16.mxu0 0
          %755 = vmatpush1.bf16.msra.mxu0 %v738
          %756 = vmatprep.subr.bf16.mxu0 0
          %757 = vmatpush2.bf16.msra.mxu0 0
          %758 = vmatprep.subr.bf16.mxu0 0
          %759 = vmatpush2.bf16.msra.mxu0 0
          %760 = vmatprep.subr.bf16.mxu0 0
          %761 = vmatpush2.bf16.msra.mxu0 0
          %762 = vmatprep.subr.bf16.mxu0 0
          %763 = vmatpush2.bf16.msra.mxu0 0
          %764 = vmatprep.subr.bf16.mxu0 0
          %765 = vmatpush2.bf16.msra.mxu0 0
          %766 = vmatprep.subr.bf16.mxu0 0
          %767 = vmatpush2.bf16.msra.mxu0 0
          %768 = vmatprep.subr.bf16.mxu0 0
          %769 = vmatpush2.bf16.msra.mxu0 0
          %770 = vmatprep.subr.bf16.mxu0 0
          %771 = vmatpush2.bf16.msra.mxu0 0
          %772 = vmatprep.mubr.bf16.mxu0 0
          %773 = vmatmul.mubr.bf16.gmra.mxu0 %v734
          %v774 = vpop.f32.mrf.mxu0
          %v775 = vadd.f32 0.0, %v774
          %v776 = vpop.f32.mrf.mxu0
          %v777 = vpop.f32.mrf.mxu0
          %v778 = vpop.f32.mrf.mxu0
          %779 = vdwg.mxu0
          %v780 = vpack.c.bf16 %v775, %v775
          %v782 = vlaneseq
          %v783 = vshrl.u32 %v782, 7
          %v784 = vsub.s32 0, %v783
          %v785 = vrot.slane %v410, %v784
          %v803 = vunpack.c.l.b16 %v394
          %v804 = vunpack.c.l.b16 %v395
          %v805 = vunpack.c.l.b16 %v396
          %v806 = vunpack.c.l.b16 %v397
          %v807 = vunpack.c.l.b16 %v398
          %v808 = vunpack.c.l.b16 %v399
          %v809 = vunpack.c.l.b16 %v400
          %v810 = vunpack.c.l.b16 %v401
          %v811 = vunpack.c.l.b16 %v402
          %v812 = vunpack.c.l.b16 %v403
          %v813 = vunpack.c.l.b16 %v404
          %v814 = vunpack.c.l.b16 %v405
          %v815 = vunpack.c.l.b16 %v406
          %v816 = vunpack.c.l.b16 %v407
          %v817 = vunpack.c.l.b16 %v408
          %v818 = vunpack.c.l.b16 %v409
          %v819 = vpack.c.b16 %v804, %v803
          %v820 = vpack.c.b16 %v806, %v805
          %v821 = vpack.c.b16 %v808, %v807
          %v822 = vpack.c.b16 %v810, %v809
          %v823 = vpack.c.b16 %v812, %v811
          %v824 = vpack.c.b16 %v814, %v813
          %v825 = vpack.c.b16 %v816, %v815
          %v826 = vpack.c.b16 %v818, %v817
          %835 = vmatprep.subr.bf16.mxu0 0
          %836 = vmatpush1.bf16.msra.mxu0 %v826
          %837 = vmatprep.subr.bf16.mxu0 0
          %838 = vmatpush1.bf16.msra.mxu0 %v825
          %839 = vmatprep.subr.bf16.mxu0 0
          %840 = vmatpush1.bf16.msra.mxu0 %v824
          %841 = vmatprep.subr.bf16.mxu0 0
          %842 = vmatpush1.bf16.msra.mxu0 %v823
          %843 = vmatprep.subr.bf16.mxu0 0
          %844 = vmatpush1.bf16.msra.mxu0 %v822
          %845 = vmatprep.subr.bf16.mxu0 0
          %846 = vmatpush1.bf16.msra.mxu0 %v821
          %847 = vmatprep.subr.bf16.mxu0 0
          %848 = vmatpush1.bf16.msra.mxu0 %v820
          %849 = vmatprep.subr.bf16.mxu0 0
          %850 = vmatpush1.bf16.msra.mxu0 %v819
          %851 = vmatprep.subr.bf16.mxu0 0
          %852 = vmatpush2.bf16.msra.mxu0 0
          %853 = vmatprep.subr.bf16.mxu0 0
          %854 = vmatpush2.bf16.msra.mxu0 0
          %855 = vmatprep.subr.bf16.mxu0 0
          %856 = vmatpush2.bf16.msra.mxu0 0
          %857 = vmatprep.subr.bf16.mxu0 0
          %858 = vmatpush2.bf16.msra.mxu0 0
          %859 = vmatprep.subr.bf16.mxu0 0
          %860 = vmatpush2.bf16.msra.mxu0 0
          %861 = vmatprep.subr.bf16.mxu0 0
          %862 = vmatpush2.bf16.msra.mxu0 0
          %863 = vmatprep.subr.bf16.mxu0 0
          %864 = vmatpush2.bf16.msra.mxu0 0
          %865 = vmatprep.subr.bf16.mxu0 0
          %866 = vmatpush2.bf16.msra.mxu0 0
          %867 = vmatprep.mubr.bf16.mxu0 0
          %868 = vmatmul.mubr.bf16.gmra.mxu0 %v780
          %v869 = vpop.f32.mrf.mxu0
          %v870 = vadd.f32 %v785, %v869
          %v871 = vpop.f32.mrf.mxu0
          %v872 = vpop.f32.mrf.mxu0
          %v873 = vpop.f32.mrf.mxu0
          %874 = vdwg.mxu0
          %v875 = vmax.f32 %v870, 0.0
          %v876 = vld [vmem:[#allocation4] sm:$0x1]
          %v877 = vrot.slane %v875, 4
          %v878 = vadd.f32 %v875, %v877
          %v879 = vrot.slane %v878, 2
          %v880 = vadd.f32 %v878, %v879
          %v881 = vrot.slane %v880, 1
          %v882 = vadd.f32 %v880, %v881
          %v883 = vadd.f32 %v876, %v882
          %884 = vst [vmem:[#allocation4] sm:$0x1] %v883
        $region76: #{tpu_custom_call.1} parent=43 // pred_fallthru
          _
        // Predicated region
        $region77: #{tpu_custom_call.1} parent=43 // pred_check
          _
        $region78: #{tpu_custom_call.1} parent=43 // pred_check_branch
          %886 = sbr.rel (%p413) target = $region80
        $region79: #{tpu_custom_call.1} parent=43 // pred_region
          %v887 = vld [vmem:[#allocation4] sm:$0x1]
          %v888 = vmul.f32 %v887, 0.125
          %v889 = vld [vmem:[#allocation11] sm:$0xff]
          %v890 = vld [vmem:[#allocation11 + $0x8] sm:$0xff]
          %v891 = vld [vmem:[#allocation11 + $0x10] sm:$0xff]
          %v892 = vld [vmem:[#allocation11 + $0x18] sm:$0xff]
          %v893 = vld [vmem:[#allocation11 + $0x20] sm:$0xff]
          %v894 = vld [vmem:[#allocation11 + $0x28] sm:$0xff]
          %v895 = vld [vmem:[#allocation11 + $0x30] sm:$0xff]
          %v896 = vld [vmem:[#allocation11 + $0x38] sm:$0xff]
          %v897 = vld [vmem:[#allocation11 + $0x40] sm:$0xff]
          %v898 = vld [vmem:[#allocation11 + $0x48] sm:$0xff]
          %v899 = vld [vmem:[#allocation11 + $0x50] sm:$0xff]
          %v900 = vld [vmem:[#allocation11 + $0x58] sm:$0xff]
          %v901 = vld [vmem:[#allocation11 + $0x60] sm:$0xff]
          %v902 = vld [vmem:[#allocation11 + $0x68] sm:$0xff]
          %v903 = vld [vmem:[#allocation11 + $0x70] sm:$0xff]
          %v904 = vld [vmem:[#allocation11 + $0x78] sm:$0xff]
          %v905 = vld [vmem:[%s5] sm:$0x1]
          %906 = vmatprep.subr.mxu0 0.0
          %907 = vmatpush1.msra.mxu0 %v904
          %908 = vmatprep.subr.mxu0 0.0
          %909 = vmatpush1.msra.mxu0 %v903
          %910 = vmatprep.subr.mxu0 0.0
          %911 = vmatpush1.msra.mxu0 %v902
          %912 = vmatprep.subr.mxu0 0.0
          %913 = vmatpush1.msra.mxu0 %v901
          %914 = vmatprep.subr.mxu0 0.0
          %915 = vmatpush1.msra.mxu0 %v900
          %916 = vmatprep.subr.mxu0 0.0
          %917 = vmatpush1.msra.mxu0 %v899
          %918 = vmatprep.subr.mxu0 0.0
          %919 = vmatpush1.msra.mxu0 %v898
          %920 = vmatprep.subr.mxu0 0.0
          %921 = vmatpush1.msra.mxu0 %v897
          %922 = vmatprep.subr.mxu0 0.0
          %923 = vmatpush1.msra.mxu0 %v896
          %924 = vmatprep.subr.mxu0 0.0
          %925 = vmatpush1.msra.mxu0 %v895
          %926 = vmatprep.subr.mxu0 0.0
          %927 = vmatpush1.msra.mxu0 %v894
          %928 = vmatprep.subr.mxu0 0.0
          %929 = vmatpush1.msra.mxu0 %v893
          %930 = vmatprep.subr.mxu0 0.0
          %931 = vmatpush1.msra.mxu0 %v892
          %932 = vmatprep.subr.mxu0 0.0
          %933 = vmatpush1.msra.mxu0 %v891
          %934 = vmatprep.subr.mxu0 0.0
          %935 = vmatpush1.msra.mxu0 %v890
          %936 = vmatprep.subr.mxu0 0.0
          %937 = vmatpush1.msra.mxu0 %v889
          %938 = vmatprep.subr.mxu0 0.0
          %939 = vmatpush2.msra.mxu0 0.0
          %940 = vmatprep.subr.mxu0 0.0
          %941 = vmatpush2.msra.mxu0 0.0
          %942 = vmatprep.subr.mxu0 0.0
          %943 = vmatpush2.msra.mxu0 0.0
          %944 = vmatprep.subr.mxu0 0.0
          %945 = vmatpush2.msra.mxu0 0.0
          %946 = vmatprep.subr.mxu0 0.0
          %947 = vmatpush2.msra.mxu0 0.0
          %948 = vmatprep.subr.mxu0 0.0
          %949 = vmatpush2.msra.mxu0 0.0
          %950 = vmatprep.subr.mxu0 0.0
          %951 = vmatpush2.msra.mxu0 0.0
          %952 = vmatprep.subr.mxu0 0.0
          %953 = vmatpush2.msra.mxu0 0.0
          %954 = vmatprep.subr.mxu0 0.0
          %955 = vmatpush2.msra.mxu0 0.0
          %956 = vmatprep.subr.mxu0 0.0
          %957 = vmatpush2.msra.mxu0 0.0
          %958 = vmatprep.subr.mxu0 0.0
          %959 = vmatpush2.msra.mxu0 0.0
          %960 = vmatprep.subr.mxu0 0.0
          %961 = vmatpush2.msra.mxu0 0.0
          %962 = vmatprep.subr.mxu0 0.0
          %963 = vmatpush2.msra.mxu0 0.0
          %964 = vmatprep.subr.mxu0 0.0
          %965 = vmatpush2.msra.mxu0 0.0
          %966 = vmatprep.subr.mxu0 0.0
          %967 = vmatpush2.msra.mxu0 0.0
          %968 = vmatprep.subr.mxu0 0.0
          %969 = vmatpush2.msra.mxu0 0.0
          %970 = vmatprep.mubr.f32.mxu0 0.0
          %971 = vmatmul.mubr.f32.gmra.mxu0 %v888
          %v972 = vpop.f32.mrf.mxu0
          %v973 = vadd.f32 %v905, %v972
          %v974 = vpop.f32.mrf.mxu0
          %975 = vdwg.mxu0
          %976 = vst [vmem:[%s387] sm:$0x1] %v973
        $region80: #{tpu_custom_call.1} parent=43 // pred_fallthru
          _
        %s977 = sand.u32 %s202, 1
        %s978 = scalar_lea.sflag [#allocation7], %s977
        %s979 = sand.u32 %s202, 1
        %s980 = scalar_lea.vmem [#allocation13], %s979
        // Predicated region
        $region81: #{tpu_custom_call.1} parent=43 // pred_check
          %p981 = pneg %p212
        $region82: #{tpu_custom_call.1} parent=43 // pred_check_branch
          %983 = sbr.rel (%p981) target = $region84
        $region83: #{tpu_custom_call.1} parent=43 // pred_region
          %s985 = ssub.s32 16, 16
          %986 = vsyncadd %s978, %s985
          %s987 = smul.addr %s32, 16
          %s988 = scalar_lea.hbm %s6, %s987
          %s990 = sshll.u32 %s980, 4
          %s991 = int_to_ptr.vmem [resolvable:$true] %s990
          %993 = dma.vmem_to_hbm [thread:$0]  %s991, 16, %s988, %s978
        $region84: #{tpu_custom_call.1} parent=43 // pred_fallthru
          _
      $region44: #{tpu_custom_call.1} parent=5 // pred_fallthru
        _
      %p994 = scmp.le.s32.totalorder 2, %s22
      // Predicated region
      $region85: #{tpu_custom_call.1} parent=5 // pred_check
        %p995 = pneg %p994
      $region86: #{tpu_custom_call.1} parent=5 // pred_check_branch
        %997 = sbr.rel (%p995) target = $region88
      $region87: #{tpu_custom_call.1} parent=5 // pred_region
        %s998 = ssub.s32 %s22, 2
        // Predicated region
        $region89: #{tpu_custom_call.1} parent=87 // pred_check
          %p999 = pneg %p218
        $region90: #{tpu_custom_call.1} parent=87 // pred_check_branch
          %1001 = sbr.rel (%p999) target = $region92
        $region91: #{tpu_custom_call.1} parent=87 // pred_region
          %s1002 = sand.u32 %s203, 1
          %s1003 = scalar_lea.sflag [#allocation7], %s1002
          %s1004 = sand.u32 %s203, 1
          %s1005 = scalar_lea.vmem [#allocation13], %s1004
          %1006 = dma.done %s1003, 16
        $region92: #{tpu_custom_call.1} parent=87 // pred_fallthru
          _
      $region88: #{tpu_custom_call.1} parent=5 // pred_fallthru
        _
    $region6: #{tpu_custom_call.1} parent=1 // loop_footer
      %s26 = sadd.s32 1, %s22
    $region7: #{tpu_custom_call.1} parent=1 // loop_footer_branch
      %21 = sbr.rel target = $region3
    $region8: #{tpu_custom_call.1} parent=1 // loop_exit
      _
    %1007 = vsyncpa [#allocation6], 1
    %s1008 = scalar_lea.sflag [#allocation6], 1
    %1009 = vsyncpa %s1008, 1
    %1010 = vsyncpa [#allocation9], 1
    %s1011 = scalar_lea.sflag [#allocation9], 1
    %1012 = vsyncpa %s1011, 1
    %1013 = vsyncpa [#allocation12], 1
    %1014 = vsyncpa [#allocation7], 1
    %s1015 = scalar_lea.sflag [#allocation7], 1
    %1016 = vsyncpa %s1015, 1

</llo_original>
